<compile_context>
chip_gen: v5e
topology: v5e:2x2
jax: 0.10.0
libtpu: 0.0.40
codegen_flags: <defaults>
</compile_context>

<pallas_src>
import math
import functools

import jax
import jax.numpy as jnp
from jax.experimental import pallas as pl
from jax.experimental.pallas import tpu as pltpu


def _chip_config():
    """Per-generation tiling / precision knobs (decided at trace time)."""
    kind = ""
    try:
        kind = jax.devices()[0].device_kind.lower()
    except Exception:
        pass
    is_v7 = "v7" in kind
    old_gen = any(t in kind for t in ("v2", "v3", "v4", "v5"))
    return {
        # v7x: 64 MiB physical VMEM per TC; v5e/v6e: 128 MiB.
        "vmem_limit": (48 if is_v7 else 96) * 1024 * 1024,
        "tm": 512 if is_v7 else 1024,          # row tile for dense kernels
        "tq": 256 if is_v7 else 512,           # query tile for attention
        "tq_long_s": 128 if is_v7 else 256,    # query tile when S is long
        "long_s": 4096,
        "max_hbd": 256 if is_v7 else 512,      # heads-per-block lane width cap
        # bf16 exp ~2x EUP throughput on v6e/v7x; v5e has no bf16 EUP/VPU.
        "exp_dtype": jnp.float32 if old_gen else jnp.bfloat16,
    }


# ----------------------------------------------------------------------------
# Kernel 1: Q/K/V projections, row-tiled over B*S, weights resident in VMEM.
#   x      : [TM, H] f32 row tile (downcast to bf16 in-kernel)
#   wq/k/v : [H, H]  bf16 (wq pre-scaled by 1/sqrt(d))
#   bq/k/v : [1, H]  f32
#   q/k/v  : [TM, H] bf16 outputs
# ----------------------------------------------------------------------------
def _qkv_kernel(x_ref, wq_ref, wk_ref, wv_ref, bq_ref, bk_ref, bv_ref,
                q_ref, k_ref, v_ref):
    # Fused activation downcast: free VALU filler under the MXU-bound matmul.
    x = x_ref[...].astype(jnp.bfloat16)
    # Three separate dots: live f32 intermediate bounded to [TM, H]; each of
    # q/k/v is biased and stored immediately.
    for w_ref, b_ref, o_ref in ((wq_ref, bq_ref, q_ref),
                                (wk_ref, bk_ref, k_ref),
                                (wv_ref, bv_ref, v_ref)):
        y = jnp.dot(x, w_ref[...], preferred_element_type=jnp.float32)
        o_ref[...] = (y + b_ref[...]).astype(o_ref.dtype)


def qkv_projection(x_f32, wq, wk, wv, bq, bk, bv, cfg):
    N, H = x_f32.shape
    TM = cfg["tm"] if N >= cfg["tm"] else N
    row_spec = pl.BlockSpec((TM, H), lambda i: (i, 0))
    w_spec = pl.BlockSpec((H, H), lambda i: (0, 0))   # resident across rows
    b_spec = pl.BlockSpec((1, H), lambda i: (0, 0))
    out_sds = jax.ShapeDtypeStruct((N, H), jnp.bfloat16)
    return pl.pallas_call(
        _qkv_kernel,
        out_shape=(out_sds, out_sds, out_sds),
        grid=(pl.cdiv(N, TM),),
        in_specs=[row_spec, w_spec, w_spec, w_spec, b_spec, b_spec, b_spec],
        out_specs=(row_spec, row_spec, row_spec),
        compiler_params=pltpu.CompilerParams(
            dimension_semantics=("parallel",),
            vmem_limit_bytes=cfg["vmem_limit"]),
    )(x_f32, wq, wk, wv, bq, bk, bv)


# ----------------------------------------------------------------------------
# Kernel 2: attention on the [B, S, H] layout (no head transposes).
#   q block : (1, TQ, hbd)   (q already scaled by 1/sqrt(d))
#   k/v     : (1, S,  hbd)   resident across query tiles
#   mask    : (1, 1,  S)     additive key mask, broadcast over query rows
#   out     : (1, TQ, hbd)   lane-dense writeback
# grid = (B, nH // hb, cdiv(S, TQ)) — q-tile axis last so K/V stay resident.
# ----------------------------------------------------------------------------
def _attn_inner(q_ref, k_ref, v_ref, o_ref, m, *,
                heads_per_block, head_dim, exp_dtype):
    for h in range(heads_per_block):                 # static unrolled loop
        lo, hi = h * head_dim, (h + 1) * head_dim
        q_h = q_ref[0, :, lo:hi]                     # [TQ, d] bf16
        k_h = k_ref[0, :, lo:hi]                     # [S,  d] bf16
        v_h = v_ref[0, :, lo:hi]                     # [S,  d] bf16
        # contract on d; no explicit k.T materialization
        s = jax.lax.dot_general(
            q_h, k_h, dimension_numbers=(((1,), (1,)), ((), ())),
            preferred_element_type=jnp.float32)      # [TQ, S] f32
        if m is not None:
            s = s + m                                # [1, S] broadcast add
        s_max = jnp.max(s, axis=-1, keepdims=True)
        # bf16 exp on v6e/v7x (EUP throughput), f32 on v5e.
        p = jnp.exp((s - s_max).astype(exp_dtype))   # [TQ, S] unnormalized
        denom = jnp.sum(p.astype(jnp.float32), axis=-1, keepdims=True)
        ctx_h = jnp.dot(p.astype(v_h.dtype), v_h,
                        preferred_element_type=jnp.float32)   # [TQ, d]
        # Deferred normalization: scale the [TQ, d] context, not [TQ, S] probs.
        ctx_h = ctx_h * pl.reciprocal(denom, approx=True)
        o_ref[0, :, lo:hi] = ctx_h.astype(o_ref.dtype)


def _attn_kernel_masked(q_ref, k_ref, v_ref, m_ref, o_ref, *,
                        heads_per_block, head_dim, exp_dtype):
    _attn_inner(q_ref, k_ref, v_ref, o_ref, m_ref[0],
                heads_per_block=heads_per_block, head_dim=head_dim,
                exp_dtype=exp_dtype)


def _attn_kernel_nomask(q_ref, k_ref, v_ref, o_ref, *,
                        heads_per_block, head_dim, exp_dtype):
    _attn_inner(q_ref, k_ref, v_ref, o_ref, None,
                heads_per_block=heads_per_block, head_dim=head_dim,
                exp_dtype=exp_dtype)


def _heads_per_block(num_heads, head_dim, max_hbd):
    """Largest lane-dense head block (hbd % 128 == 0) under the per-gen cap."""
    best = None
    for hb in range(1, num_heads + 1):
        hbd = hb * head_dim
        if num_heads % hb == 0 and hbd % 128 == 0 and hbd <= max_hbd:
            best = hb
    if best is not None:
        return best
    # Fallback: all heads per step (block last dim == full H, always legal).
    return num_heads


def attention(q, k, v, mask, num_heads, head_dim, cfg):
    B, S, H = q.shape
    hb = _heads_per_block(num_heads, head_dim, cfg["max_hbd"])
    hbd = hb * head_dim
    tq_pref = cfg["tq_long_s"] if S >= cfg["long_s"] else cfg["tq"]
    TQ = tq_pref if S >= tq_pref else S
    grid = (B, num_heads // hb, pl.cdiv(S, TQ))      # q-tile last: K/V reuse

    q_spec = pl.BlockSpec((1, TQ, hbd), lambda b, h, t: (b, t, h))
    kv_spec = pl.BlockSpec((1, S, hbd), lambda b, h, t: (b, 0, h))
    o_spec = pl.BlockSpec((1, TQ, hbd), lambda b, h, t: (b, t, h))

    kernel_kw = dict(heads_per_block=hb, head_dim=head_dim,
                     exp_dtype=cfg["exp_dtype"])
    if mask is None:
        kernel = functools.partial(_attn_kernel_nomask, **kernel_kw)
        in_specs = [q_spec, kv_spec, kv_spec]
        args = (q, k, v)
    else:
        kernel = functools.partial(_attn_kernel_masked, **kernel_kw)
        in_specs = [q_spec, kv_spec, kv_spec,
                    pl.BlockSpec((1, 1, S), lambda b, h, t: (b, 0, 0))]
        args = (q, k, v, mask)

    return pl.pallas_call(
        kernel,
        out_shape=jax.ShapeDtypeStruct((B, S, H), jnp.bfloat16),
        grid=grid,
        in_specs=in_specs,
        out_specs=o_spec,
        compiler_params=pltpu.CompilerParams(
            # Every (b, h, t) writes a distinct output block; K/V residency
            # across the q-tile axis comes from the index_map, not semantics.
            dimension_semantics=("parallel", "parallel", "parallel"),
            vmem_limit_bytes=cfg["vmem_limit"]),
    )(*args)


# ----------------------------------------------------------------------------
# Kernel 3: RobertaSelfOutput — dense + residual + LayerNorm (fused, row-tiled)
#   ctx : [TM, H] bf16; res : [TM, H] f32; out : [TM, H] bf16
# ----------------------------------------------------------------------------
def _out_kernel(ctx_ref, res_ref, w_ref, b_ref, g_ref, beta_ref, o_ref, *, eps):
    y = jnp.dot(ctx_ref[...], w_ref[...], preferred_element_type=jnp.float32)
    y = y + b_ref[...] + res_ref[...]                # bias + residual (f32)
    mean = jnp.mean(y, axis=-1, keepdims=True)
    yc = y - mean
    var = jnp.mean(yc * yc, axis=-1, keepdims=True)
    inv = jax.lax.rsqrt(var + eps)
    o_ref[...] = (yc * inv * g_ref[...] + beta_ref[...]).astype(o_ref.dtype)


def output_projection(ctx_bf16, residual_f32, w_bf16, b_f32, gamma, beta, eps,
                      cfg):
    N, H = ctx_bf16.shape
    TM = cfg["tm"] if N >= cfg["tm"] else N
    row_spec = pl.BlockSpec((TM, H), lambda i: (i, 0))
    vec_spec = pl.BlockSpec((1, H), lambda i: (0, 0))
    return pl.pallas_call(
        functools.partial(_out_kernel, eps=eps),
        out_shape=jax.ShapeDtypeStruct((N, H), jnp.bfloat16),   # bf16 writeback
        grid=(pl.cdiv(N, TM),),
        in_specs=[row_spec, row_spec,
                  pl.BlockSpec((H, H), lambda i: (0, 0)),   # resident weight
                  vec_spec, vec_spec, vec_spec],
        out_specs=row_spec,
        compiler_params=pltpu.CompilerParams(
            dimension_semantics=("parallel",),
            vmem_limit_bytes=cfg["vmem_limit"]),
    )(ctx_bf16, residual_f32, w_bf16, b_f32, gamma, beta)


# ----------------------------------------------------------------------------
# Module wrapper
# ----------------------------------------------------------------------------
class RobertaAttentionPallas:
    def __init__(self, hidden_size, num_attention_heads, key,
                 layer_norm_eps=1e-12):
        assert hidden_size % num_attention_heads == 0
        self.H = hidden_size
        self.nH = num_attention_heads
        self.d = hidden_size // num_attention_heads
        self.eps = layer_norm_eps
        self.cfg = _chip_config()

        ks = jax.random.split(key, 8)
        bound = 1.0 / math.sqrt(hidden_size)
        init = lambda k, s: jax.random.uniform(k, s, jnp.float32, -bound, bound)
        # master fp32 params, stored [H_in, H_out] so y = x @ W + b
        self.wq = init(ks[0], (hidden_size, hidden_size))
        self.wk = init(ks[1], (hidden_size, hidden_size))
        self.wv = init(ks[2], (hidden_size, hidden_size))
        self.bq = init(ks[3], (1, hidden_size))
        self.bk = init(ks[4], (1, hidden_size))
        self.bv = init(ks[5], (1, hidden_size))
        # RobertaSelfOutput (standard HF: dense + dropout + LayerNorm residual)
        self.wo = init(ks[6], (hidden_size, hidden_size))
        self.bo = init(ks[7], (1, hidden_size))
        self.gamma = jnp.ones((1, hidden_size), jnp.float32)
        self.beta = jnp.zeros((1, hidden_size), jnp.float32)

        # Kernel-side params: 1/sqrt(d) folded into Q, bf16 weights for MXU.
        scale = 1.0 / math.sqrt(self.d)
        self.wq_s_bf16 = (self.wq * scale).astype(jnp.bfloat16)
        self.wk_bf16 = self.wk.astype(jnp.bfloat16)
        self.wv_bf16 = self.wv.astype(jnp.bfloat16)
        self.bq_s = self.bq * scale                  # f32 [1, H]
        self.wo_bf16 = self.wo.astype(jnp.bfloat16)

    def __call__(self, hidden_states, attention_mask=None):
        B, S, H = hidden_states.shape
        N = B * S
        x2d = hidden_states.reshape(N, H).astype(jnp.float32)

        # f32 rows in, bf16 q/k/v out (downcast fused into the kernel).
        q2d, k2d, v2d = qkv_projection(
            x2d, self.wq_s_bf16, self.wk_bf16, self.wv_bf16,
            self.bq_s, self.bk, self.bv, self.cfg)
        q = q2d.reshape(B, S, H)       # free reshapes; no head transposes
        k = k2d.reshape(B, S, H)
        v = v2d.reshape(B, S, H)

        if attention_mask is None:
            mask = None                # mask-free kernel variant (no zero DMA)
        else:
            # HF additive key mask [B,1,1,S] (or [B,S]) -> [B,1,S]; broadcast
            # over query rows happens inside the kernel.
            # TODO(synk): full per-query [B,1,S,S] masks not supported.
            mask = attention_mask.astype(jnp.float32).reshape(B, 1, S)

        ctx = attention(q, k, v, mask, self.nH, self.d, self.cfg)   # bf16
        out = output_projection(ctx.reshape(N, H), x2d, self.wo_bf16,
                                self.bo, self.gamma, self.beta, self.eps,
                                self.cfg)                           # bf16
        return (out.reshape(B, S, H),)


# ----------------------------------------------------------------------------
# Pure-JAX fp32 reference (PyTorch semantics) for a correctness check
# ----------------------------------------------------------------------------
def reference_forward(m, hidden_states, attention_mask):
    B, S, H = hidden_states.shape
    nH, d = m.nH, m.d
    x = hidden_states.astype(jnp.float32)
    q = x @ m.wq + m.bq[0]
    k = x @ m.wk + m.bk[0]
    v = x @ m.wv + m.bv[0]
    sh = lambda t: t.reshape(B, S, nH, d).transpose(0, 2, 1, 3)
    q, k, v = sh(q), sh(k), sh(v)
    scores = jnp.einsum("bhqd,bhkd->bhqk", q, k) / math.sqrt(d)
    if attention_mask is not None:
        scores = scores + attention_mask
    probs = jax.nn.softmax(scores, axis=-1)
    ctx = jnp.einsum("bhqk,bhkd->bhqd", probs, v)
    ctx = ctx.transpose(0, 2, 1, 3).reshape(B, S, H)
    y = ctx @ m.wo + m.bo[0] + x
    mu = jnp.mean(y, axis=-1, keepdims=True)
    var = jnp.mean((y - mu) ** 2, axis=-1, keepdims=True)
    return (y - mu) / jnp.sqrt(var + m.eps) * m.gamma[0] + m.beta[0]


if __name__ == "__main__":
    key = jax.random.PRNGKey(0)
    k_param, k_x, k_mask = jax.random.split(key, 3)

    B, S, H, nH = 2, 8, 32, 4   # small config: hidden=32, 4 heads, head_dim=8
    module = RobertaAttentionPallas(H, nH, k_param)

    hidden_states = jax.random.normal(k_x, (B, S, H), jnp.float32)
    # HF-style additive key mask: 0 for attend, -10000 for masked, [B,1,1,S]
    keep = (jax.random.uniform(k_mask, (B, 1, 1, S)) > 0.2).astype(jnp.float32)
    attention_mask = (1.0 - keep) * -10000.0

    (out,) = module(hidden_states, attention_mask)
    out = jax.block_until_ready(out)
    ref = reference_forward(module, hidden_states, attention_mask)
    assert out.shape == (B, S, H)
    # bf16 activations/output + approx reciprocal => loose-ish tolerance.
    err = float(jnp.max(jnp.abs(out.astype(jnp.float32) - ref)))
    assert err < 6e-2, f"masked path max abs err {err}"

    # mask-free kernel variant
    (out2,) = module(hidden_states, None)
    out2 = jax.block_until_ready(out2)
    ref2 = reference_forward(module, hidden_states, None)
    err2 = float(jnp.max(jnp.abs(out2.astype(jnp.float32) - ref2)))
    assert err2 < 6e-2, f"mask-free path max abs err {err2}"

    print("KERNEL_OK")
</pallas_src>

<mosaic_0001>
module attributes {stable_mosaic.version = 11 : i64} {
  func.func @_qkv_kernel(%arg0: i32, %arg1: memref<16x32xf32, #tpu.memory_space<vmem>>, %arg2: memref<32x32xbf16, #tpu.memory_space<vmem>>, %arg3: memref<32x32xbf16, #tpu.memory_space<vmem>>, %arg4: memref<32x32xbf16, #tpu.memory_space<vmem>>, %arg5: memref<1x32xf32, #tpu.memory_space<vmem>>, %arg6: memref<1x32xf32, #tpu.memory_space<vmem>>, %arg7: memref<1x32xf32, #tpu.memory_space<vmem>>, %arg8: memref<16x32xbf16, #tpu.memory_space<vmem>>, %arg9: memref<16x32xbf16, #tpu.memory_space<vmem>>, %arg10: memref<16x32xbf16, #tpu.memory_space<vmem>>) attributes {dimension_semantics = [#tpu.dimension_semantics<parallel>], iteration_bounds = array<i64: 1>, scalar_prefetch = 0 : i64, scratch_operands = 0 : i64, tpu.core_type = #tpu.core_type<tc>, window_params = [{transform_indices = @transform_0, window_bounds = array<i64: 16, 32>}, {pipeline_mode = #tpu.pipeline_mode<synchronous>, transform_indices = @transform_1, window_bounds = array<i64: 32, 32>}, {pipeline_mode = #tpu.pipeline_mode<synchronous>, transform_indices = @transform_2, window_bounds = array<i64: 32, 32>}, {pipeline_mode = #tpu.pipeline_mode<synchronous>, transform_indices = @transform_3, window_bounds = array<i64: 32, 32>}, {pipeline_mode = #tpu.pipeline_mode<synchronous>, transform_indices = @transform_4, window_bounds = array<i64: 1, 32>}, {pipeline_mode = #tpu.pipeline_mode<synchronous>, transform_indices = @transform_5, window_bounds = array<i64: 1, 32>}, {pipeline_mode = #tpu.pipeline_mode<synchronous>, transform_indices = @transform_6, window_bounds = array<i64: 1, 32>}, {transform_indices = @transform_7, window_bounds = array<i64: 16, 32>}, {transform_indices = @transform_8, window_bounds = array<i64: 16, 32>}, {transform_indices = @transform_9, window_bounds = array<i64: 16, 32>}]} {
    %c0 = arith.constant 0 : index
    %c0_0 = arith.constant 0 : index
    %0 = vector.load %arg1[%c0, %c0_0] : memref<16x32xf32, #tpu.memory_space<vmem>>, vector<16x32xf32>
    %1 = arith.truncf %0 : vector<16x32xf32> to vector<16x32xbf16>
    %c0_1 = arith.constant 0 : index
    %c0_2 = arith.constant 0 : index
    %2 = vector.load %arg2[%c0_1, %c0_2] : memref<32x32xbf16, #tpu.memory_space<vmem>>, vector<32x32xbf16>
    %cst = arith.constant dense<0.000000e+00> : vector<16x32xf32>
    %3 = tpu.matmul %1, %2, %cst {dimension_numbers = #tpu.dot_dimension_numbers<[1], [0], [0], [1], [0, 0, 1, 1], [], []>} : vector<16x32xbf16>, vector<32x32xbf16>, vector<16x32xf32> -> vector<16x32xf32>
    %c0_3 = arith.constant 0 : index
    %c0_4 = arith.constant 0 : index
    %4 = vector.load %arg5[%c0_3, %c0_4] : memref<1x32xf32, #tpu.memory_space<vmem>>, vector<1x32xf32>
    %5 = vector.broadcast %4 : vector<1x32xf32> to vector<16x32xf32>
    %6 = arith.addf %3, %5 : vector<16x32xf32>
    %7 = arith.truncf %6 : vector<16x32xf32> to vector<16x32xbf16>
    %c0_5 = arith.constant 0 : index
    %c0_6 = arith.constant 0 : index
    %8 = vector.load %arg8[%c0_5, %c0_6] : memref<16x32xbf16, #tpu.memory_space<vmem>>, vector<16x32xbf16>
    tpu.vector_store %arg8[%c0_5, %c0_6], %7 {strides = array<i32>} : memref<16x32xbf16, #tpu.memory_space<vmem>>, vector<16x32xbf16>,
    %c0_7 = arith.constant 0 : index
    %c0_8 = arith.constant 0 : index
    %9 = vector.load %arg3[%c0_7, %c0_8] : memref<32x32xbf16, #tpu.memory_space<vmem>>, vector<32x32xbf16>
    %cst_9 = arith.constant dense<0.000000e+00> : vector<16x32xf32>
    %10 = tpu.matmul %1, %9, %cst_9 {dimension_numbers = #tpu.dot_dimension_numbers<[1], [0], [0], [1], [0, 0, 1, 1], [], []>} : vector<16x32xbf16>, vector<32x32xbf16>, vector<16x32xf32> -> vector<16x32xf32>
    %c0_10 = arith.constant 0 : index
    %c0_11 = arith.constant 0 : index
    %11 = vector.load %arg6[%c0_10, %c0_11] : memref<1x32xf32, #tpu.memory_space<vmem>>, vector<1x32xf32>
    %12 = vector.broadcast %11 : vector<1x32xf32> to vector<16x32xf32>
    %13 = arith.addf %10, %12 : vector<16x32xf32>
    %14 = arith.truncf %13 : vector<16x32xf32> to vector<16x32xbf16>
    %c0_12 = arith.constant 0 : index
    %c0_13 = arith.constant 0 : index
    %15 = vector.load %arg9[%c0_12, %c0_13] : memref<16x32xbf16, #tpu.memory_space<vmem>>, vector<16x32xbf16>
    tpu.vector_store %arg9[%c0_12, %c0_13], %14 {strides = array<i32>} : memref<16x32xbf16, #tpu.memory_space<vmem>>, vector<16x32xbf16>,
    %c0_14 = arith.constant 0 : index
    %c0_15 = arith.constant 0 : index
    %16 = vector.load %arg4[%c0_14, %c0_15] : memref<32x32xbf16, #tpu.memory_space<vmem>>, vector<32x32xbf16>
    %cst_16 = arith.constant dense<0.000000e+00> : vector<16x32xf32>
    %17 = tpu.matmul %1, %16, %cst_16 {dimension_numbers = #tpu.dot_dimension_numbers<[1], [0], [0], [1], [0, 0, 1, 1], [], []>} : vector<16x32xbf16>, vector<32x32xbf16>, vector<16x32xf32> -> vector<16x32xf32>
    %c0_17 = arith.constant 0 : index
    %c0_18 = arith.constant 0 : index
    %18 = vector.load %arg7[%c0_17, %c0_18] : memref<1x32xf32, #tpu.memory_space<vmem>>, vector<1x32xf32>
    %19 = vector.broadcast %18 : vector<1x32xf32> to vector<16x32xf32>
    %20 = arith.addf %17, %19 : vector<16x32xf32>
    %21 = arith.truncf %20 : vector<16x32xf32> to vector<16x32xbf16>
    %c0_19 = arith.constant 0 : index
    %c0_20 = arith.constant 0 : index
    %22 = vector.load %arg10[%c0_19, %c0_20] : memref<16x32xbf16, #tpu.memory_space<vmem>>, vector<16x32xbf16>
    tpu.vector_store %arg10[%c0_19, %c0_20], %21 {strides = array<i32>} : memref<16x32xbf16, #tpu.memory_space<vmem>>, vector<16x32xbf16>,
    return
  }
  func.func @transform_0(%arg0: i32) -> (i32, i32) {
    %c0_i32 = arith.constant 0 : i32
    %c0_i32_0 = arith.constant 0 : i32
    return %arg0, %c0_i32 : i32, i32
  }
  func.func @transform_1(%arg0: i32) -> (i32, i32) {
    %c0_i32 = arith.constant 0 : i32
    %c0_i32_0 = arith.constant 0 : i32
    %c0_i32_1 = arith.constant 0 : i32
    return %c0_i32, %c0_i32_0 : i32, i32
  }
  func.func @transform_2(%arg0: i32) -> (i32, i32) {
    %c0_i32 = arith.constant 0 : i32
    %c0_i32_0 = arith.constant 0 : i32
    %c0_i32_1 = arith.constant 0 : i32
    return %c0_i32, %c0_i32_0 : i32, i32
  }
  func.func @transform_3(%arg0: i32) -> (i32, i32) {
    %c0_i32 = arith.constant 0 : i32
    %c0_i32_0 = arith.constant 0 : i32
    %c0_i32_1 = arith.constant 0 : i32
    return %c0_i32, %c0_i32_0 : i32, i32
  }
  func.func @transform_4(%arg0: i32) -> (i32, i32) {
    %c0_i32 = arith.constant 0 : i32
    %c0_i32_0 = arith.constant 0 : i32
    %c0_i32_1 = arith.constant 0 : i32
    return %c0_i32, %c0_i32_0 : i32, i32
  }
  func.func @transform_5(%arg0: i32) -> (i32, i32) {
    %c0_i32 = arith.constant 0 : i32
    %c0_i32_0 = arith.constant 0 : i32
    %c0_i32_1 = arith.constant 0 : i32
    return %c0_i32, %c0_i32_0 : i32, i32
  }
  func.func @transform_6(%arg0: i32) -> (i32, i32) {
    %c0_i32 = arith.constant 0 : i32
    %c0_i32_0 = arith.constant 0 : i32
    %c0_i32_1 = arith.constant 0 : i32
    return %c0_i32, %c0_i32_0 : i32, i32
  }
  func.func @transform_7(%arg0: i32) -> (i32, i32) {
    %c0_i32 = arith.constant 0 : i32
    %c0_i32_0 = arith.constant 0 : i32
    return %arg0, %c0_i32 : i32, i32
  }
  func.func @transform_8(%arg0: i32) -> (i32, i32) {
    %c0_i32 = arith.constant 0 : i32
    %c0_i32_0 = arith.constant 0 : i32
    return %arg0, %c0_i32 : i32, i32
  }
  func.func @transform_9(%arg0: i32) -> (i32, i32) {
    %c0_i32 = arith.constant 0 : i32
    %c0_i32_0 = arith.constant 0 : i32
    return %arg0, %c0_i32 : i32, i32
  }
}

</mosaic_0001>

<llo_original>
// kernel: tpu_custom_call.1
$region0: #{tpu_custom_call.1}
  #allocation0 [shape = 'u32[]', space=smem, size = 0x4, offset = 0x4, fixed_abs, tag = 'smem constant byte address 0x4 - core index']
  #allocation1 [shape = 'u32[72,128]{1,0:T(1,128)}', space=vmem, size = 0x9000, scoped, tag = 'internal scratch']
  %s0 = inlined_call_operand.hbm [shape: f32[16,32], index: 0, kind: input, shape index: {}]
  %s1 = inlined_call_operand.hbm [shape: bf16[32,32], index: 1, kind: input, shape index: {}]
  %s2 = inlined_call_operand.hbm [shape: bf16[32,32], index: 2, kind: input, shape index: {}]
  %s3 = inlined_call_operand.hbm [shape: bf16[32,32], index: 3, kind: input, shape index: {}]
  %s4 = inlined_call_operand.vmem [shape: f32[1,32], index: 4, kind: input, shape index: {}]
  %s5 = inlined_call_operand.vmem [shape: f32[1,32], index: 5, kind: input, shape index: {}]
  %s6 = inlined_call_operand.vmem [shape: f32[1,32], index: 6, kind: input, shape index: {}]
  %s7 = inlined_call_operand.hbm [shape: bf16[16,32], index: 7, kind: output, shape index: {0}]
  %s8 = inlined_call_operand.hbm [shape: bf16[16,32], index: 8, kind: output, shape index: {1}]
  %s9 = inlined_call_operand.hbm [shape: bf16[16,32], index: 9, kind: output, shape index: {2}]
  %10 = xla_tuple %s7, %s8, %s9
  %s11 = sld [smem:[#allocation0]]
  $region70: #{tpu_custom_call.1} parent=0
    _
  %s13 = ssub.s32 1, %s11
  %s14 = scalar_select 0, %s13, %s11
  $region1: #{tpu_custom_call.1} parent=0
    #allocation2 [shape = 'u8[8192]{0}', space=vmem, size = 0x2000, scoped, tag = 'input window, operand 0, single buffered']
    #allocation3 [shape = 's32[1]{0}', space=sflag, size = 0x4, scoped, tag = 'scoped memory for tpu_custom_call.1']
    #allocation4 [shape = 's32[1]{0}', space=sflag, size = 0x4, scoped, tag = 'scoped memory for tpu_custom_call.1']
    #allocation5 [shape = 'u8[8192]{0}', space=vmem, size = 0x2000, scoped, tag = 'input window, operand 1, single buffered']
    #allocation6 [shape = 's32[1]{0}', space=sflag, size = 0x4, scoped, tag = 'scoped memory for tpu_custom_call.1']
    #allocation7 [shape = 'u8[8192]{0}', space=vmem, size = 0x2000, scoped, tag = 'input window, operand 2, single buffered']
    #allocation8 [shape = 'u8[8192]{0}', space=vmem, size = 0x2000, scoped, tag = 'input window, operand 3, single buffered']
    #allocation9 [shape = 's32[1]{0}', space=sflag, size = 0x4, scoped, tag = 'scoped memory for tpu_custom_call.1']
    #allocation10 [shape = 'u8[4096]{0}', space=vmem, size = 0x1000, scoped, tag = 'output window, operand 0, single buffered']
    #allocation11 [shape = 'u8[4096]{0}', space=vmem, size = 0x1000, scoped, tag = 'output window, operand 1, single buffered']
    #allocation12 [shape = 's32[1]{0}', space=sflag, size = 0x4, scoped, tag = 'scoped memory for tpu_custom_call.1']
    #allocation13 [shape = 'u8[4096]{0}', space=vmem, size = 0x1000, scoped, tag = 'output window, operand 2, single buffered']
    %15 = vsyncpa [#allocation3], 0
    %16 = vsyncpa [#allocation6], 0
    %17 = vsyncpa [#allocation9], 0
    %18 = vsyncpa [#allocation4], 0
    %19 = vsyncpa [#allocation12], 0
    // Predicated region
    $region2: #{tpu_custom_call.1} parent=1 // pred_check
      _
    $region3: #{tpu_custom_call.1} parent=1 // pred_check_branch
      %21 = sbr.rel (0) target = $region5
    $region4: #{tpu_custom_call.1} parent=1 // pred_region
      %23 = vsyncadd [#allocation3], 0
      %s24 = sshll.u32 %s0, 4
      %s25 = int_to_ptr.hbm [resolvable:$true] %s24
      %s26 = sshll.u32 [#allocation2], 4
      %s27 = int_to_ptr.vmem [resolvable:$true] %s26
      %32 = dma.hbm_to_vmem [thread:$0]  %s25, 256, %s27, [#allocation3], 128, 128, 8
    $region5: #{tpu_custom_call.1} parent=1 // pred_fallthru
      _
    // Predicated region
    $region6: #{tpu_custom_call.1} parent=1 // pred_check
      _
    $region7: #{tpu_custom_call.1} parent=1 // pred_check_branch
      %34 = sbr.rel (0) target = $region9
    $region8: #{tpu_custom_call.1} parent=1 // pred_region
      %36 = vsyncadd [#allocation6], 0
      %s37 = sshll.u32 %s1, 4
      %s38 = int_to_ptr.hbm [resolvable:$true] %s37
      %s39 = sshll.u32 [#allocation5], 4
      %s40 = int_to_ptr.vmem [resolvable:$true] %s39
      %45 = dma.hbm_to_vmem [thread:$0]  %s38, 256, %s40, [#allocation6], 64, 64, 4
    $region9: #{tpu_custom_call.1} parent=1 // pred_fallthru
      _
    // Predicated region
    $region10: #{tpu_custom_call.1} parent=1 // pred_check
      _
    $region11: #{tpu_custom_call.1} parent=1 // pred_check_branch
      %47 = sbr.rel (0) target = $region13
    $region12: #{tpu_custom_call.1} parent=1 // pred_region
      %49 = vsyncadd [#allocation6], 0
      %s50 = sshll.u32 %s2, 4
      %s51 = int_to_ptr.hbm [resolvable:$true] %s50
      %s52 = sshll.u32 [#allocation7], 4
      %s53 = int_to_ptr.vmem [resolvable:$true] %s52
      %58 = dma.hbm_to_vmem [thread:$0]  %s51, 256, %s53, [#allocation6], 64, 64, 4
    $region13: #{tpu_custom_call.1} parent=1 // pred_fallthru
      _
    // Predicated region
    $region14: #{tpu_custom_call.1} parent=1 // pred_check
      _
    $region15: #{tpu_custom_call.1} parent=1 // pred_check_branch
      %60 = sbr.rel (0) target = $region17
    $region16: #{tpu_custom_call.1} parent=1 // pred_region
      %62 = vsyncadd [#allocation9], 0
      %s63 = sshll.u32 %s3, 4
      %s64 = int_to_ptr.hbm [resolvable:$true] %s63
      %s65 = sshll.u32 [#allocation8], 4
      %s66 = int_to_ptr.vmem [resolvable:$true] %s65
      %71 = dma.hbm_to_vmem [thread:$0]  %s64, 256, %s66, [#allocation9], 64, 64, 4
    $region17: #{tpu_custom_call.1} parent=1 // pred_fallthru
      _
    // Predicated region
    $region18: #{tpu_custom_call.1} parent=1 // pred_check
      _
    $region19: #{tpu_custom_call.1} parent=1 // pred_check_branch
      %73 = sbr.rel (0) target = $region21
    $region20: #{tpu_custom_call.1} parent=1 // pred_region
      _
    $region21: #{tpu_custom_call.1} parent=1 // pred_fallthru
      _
    // Predicated region
    $region22: #{tpu_custom_call.1} parent=1 // pred_check
      _
    $region23: #{tpu_custom_call.1} parent=1 // pred_check_branch
      %75 = sbr.rel (0) target = $region25
    $region24: #{tpu_custom_call.1} parent=1 // pred_region
      _
    $region25: #{tpu_custom_call.1} parent=1 // pred_fallthru
      _
    // Predicated region
    $region26: #{tpu_custom_call.1} parent=1 // pred_check
      _
    $region27: #{tpu_custom_call.1} parent=1 // pred_check_branch
      %77 = sbr.rel (0) target = $region29
    $region28: #{tpu_custom_call.1} parent=1 // pred_region
      _
    $region29: #{tpu_custom_call.1} parent=1 // pred_fallthru
      _
    // Predicated region
    $region30: #{tpu_custom_call.1} parent=1 // pred_check
      _
    $region31: #{tpu_custom_call.1} parent=1 // pred_check_branch
      %79 = sbr.rel (0) target = $region33
    $region32: #{tpu_custom_call.1} parent=1 // pred_region
      %81 = dma.done [#allocation3], 256
    $region33: #{tpu_custom_call.1} parent=1 // pred_fallthru
      _
    // Predicated region
    $region34: #{tpu_custom_call.1} parent=1 // pred_check
      _
    $region35: #{tpu_custom_call.1} parent=1 // pred_check_branch
      %83 = sbr.rel (0) target = $region37
    $region36: #{tpu_custom_call.1} parent=1 // pred_region
      %85 = dma.done [#allocation6], 256
    $region37: #{tpu_custom_call.1} parent=1 // pred_fallthru
      _
    // Predicated region
    $region38: #{tpu_custom_call.1} parent=1 // pred_check
      _
    $region39: #{tpu_custom_call.1} parent=1 // pred_check_branch
      %87 = sbr.rel (0) target = $region41
    $region40: #{tpu_custom_call.1} parent=1 // pred_region
      %89 = dma.done [#allocation6], 256
    $region41: #{tpu_custom_call.1} parent=1 // pred_fallthru
      _
    // Predicated region
    $region42: #{tpu_custom_call.1} parent=1 // pred_check
      _
    $region43: #{tpu_custom_call.1} parent=1 // pred_check_branch
      %91 = sbr.rel (0) target = $region45
    $region44: #{tpu_custom_call.1} parent=1 // pred_region
      %93 = dma.done [#allocation9], 256
    $region45: #{tpu_custom_call.1} parent=1 // pred_fallthru
      _
    %v95 = vld [vmem:[#allocation2] sm:$0xff]
    %v96 = vld [vmem:[#allocation2 + $0x8] sm:$0xff]
    %v97 = vpack.c.bf16 %v96, %v95
    %v98 = vld [vmem:[#allocation5] sm:$0xf]
    %v99 = vld [vmem:[#allocation5 + $0x4] sm:$0xf]
    %v100 = vld [vmem:[#allocation5 + $0x8] sm:$0xf]
    %v101 = vld [vmem:[#allocation5 + $0xc] sm:$0xf]
    %v102 = vld [vmem:[%s4] sm:$0x1]
    %v104 = vperm.slane %v102, 0
    %v110 = vunpack.c.l.b16 %v98
    %v111 = vunpack.c.l.b16 %v99
    %v112 = vunpack.c.l.b16 %v100
    %v113 = vunpack.c.l.b16 %v101
    %v114 = vpack.c.b16 %v111, %v110
    %v115 = vpack.c.b16 %v113, %v112
    %vm118 = vcmask 261120
    %v120 = vsel %vm118, %v97, 0
    %122 = vmatpush.bf16.msra.mxu0 0
    %123 = vmatpush.bf16.msra.mxu0 0
    %124 = vmatpush.bf16.msra.mxu0 0
    %125 = vmatpush.bf16.msra.mxu0 0
    %126 = vmatpush.bf16.msra.mxu0 0
    %127 = vmatpush.bf16.msra.mxu0 0
    %128 = vmatpush.bf16.msra.mxu0 %v115
    %129 = vmatpush.bf16.msra.mxu0 %v114
    %130 = vmatmul.bf16.gmra.mxu0 %v120
    %v131 = vpop.f32.mrf.mxu0
    %v132 = vadd.f32 %v104, %v131
    %v133 = vpop.f32.mrf.mxu0
    %v134 = vadd.f32 %v104, %v133
    %135 = vdwg.mxu0
    %v136 = vpack.c.bf16 %v132, %v132
    %v137 = vpack.c.bf16 %v134, %v134
    %vm138 = vcmask 257024
    %139 = vst.msk [vmem:[#allocation10] sm:$0xf] %vm138, %v136
    %140 = vst.msk [vmem:[#allocation10 + $0x4] sm:$0xf] %vm138, %v137
    %v141 = vld [vmem:[#allocation7] sm:$0xf]
    %v142 = vld [vmem:[#allocation7 + $0x4] sm:$0xf]
    %v143 = vld [vmem:[#allocation7 + $0x8] sm:$0xf]
    %v144 = vld [vmem:[#allocation7 + $0xc] sm:$0xf]
    %v145 = vld [vmem:[%s5] sm:$0x1]
    %v147 = vperm.slane %v145, 0
    %v153 = vunpack.c.l.b16 %v141
    %v154 = vunpack.c.l.b16 %v142
    %v155 = vunpack.c.l.b16 %v143
    %v156 = vunpack.c.l.b16 %v144
    %v157 = vpack.c.b16 %v154, %v153
    %v158 = vpack.c.b16 %v156, %v155
    %161 = vmatpush.bf16.msra.mxu0 0
    %162 = vmatpush.bf16.msra.mxu0 0
    %163 = vmatpush.bf16.msra.mxu0 0
    %164 = vmatpush.bf16.msra.mxu0 0
    %165 = vmatpush.bf16.msra.mxu0 0
    %166 = vmatpush.bf16.msra.mxu0 0
    %167 = vmatpush.bf16.msra.mxu0 %v158
    %168 = vmatpush.bf16.msra.mxu0 %v157
    %169 = vmatmul.bf16.gmra.mxu0 %v120
    %v170 = vpop.f32.mrf.mxu0
    %v171 = vadd.f32 %v147, %v170
    %v172 = vpop.f32.mrf.mxu0
    %v173 = vadd.f32 %v147, %v172
    %174 = vdwg.mxu0
    %v175 = vpack.c.bf16 %v171, %v171
    %v176 = vpack.c.bf16 %v173, %v173
    %177 = vst.msk [vmem:[#allocation11] sm:$0xf] %vm138, %v175
    %178 = vst.msk [vmem:[#allocation11 + $0x4] sm:$0xf] %vm138, %v176
    %v179 = vld [vmem:[#allocation8] sm:$0xf]
    %v180 = vld [vmem:[#allocation8 + $0x4] sm:$0xf]
    %v181 = vld [vmem:[#allocation8 + $0x8] sm:$0xf]
    %v182 = vld [vmem:[#allocation8 + $0xc] sm:$0xf]
    %v183 = vld [vmem:[%s6] sm:$0x1]
    %v185 = vperm.slane %v183, 0
    %v191 = vunpack.c.l.b16 %v179
    %v192 = vunpack.c.l.b16 %v180
    %v193 = vunpack.c.l.b16 %v181
    %v194 = vunpack.c.l.b16 %v182
    %v195 = vpack.c.b16 %v192, %v191
    %v196 = vpack.c.b16 %v194, %v193
    %199 = vmatpush.bf16.msra.mxu0 0
    %200 = vmatpush.bf16.msra.mxu0 0
    %201 = vmatpush.bf16.msra.mxu0 0
    %202 = vmatpush.bf16.msra.mxu0 0
    %203 = vmatpush.bf16.msra.mxu0 0
    %204 = vmatpush.bf16.msra.mxu0 0
    %205 = vmatpush.bf16.msra.mxu0 %v196
    %206 = vmatpush.bf16.msra.mxu0 %v195
    %207 = vmatmul.bf16.gmra.mxu0 %v120
    %v208 = vpop.f32.mrf.mxu0
    %v209 = vadd.f32 %v185, %v208
    %v210 = vpop.f32.mrf.mxu0
    %v211 = vadd.f32 %v185, %v210
    %212 = vdwg.mxu0
    %v213 = vpack.c.bf16 %v209, %v209
    %v214 = vpack.c.bf16 %v211, %v211
    %215 = vst.msk [vmem:[#allocation13] sm:$0xf] %vm138, %v213
    %216 = vst.msk [vmem:[#allocation13 + $0x4] sm:$0xf] %vm138, %v214
    // Predicated region
    $region46: #{tpu_custom_call.1} parent=1 // pred_check
      _
    $region47: #{tpu_custom_call.1} parent=1 // pred_check_branch
      %218 = sbr.rel (0) target = $region49
    $region48: #{tpu_custom_call.1} parent=1 // pred_region
      %220 = vsyncadd [#allocation4], 0
      %s221 = sshll.u32 [#allocation10], 4
      %s222 = int_to_ptr.vmem [resolvable:$true] %s221
      %s223 = sshll.u32 %s7, 4
      %s224 = int_to_ptr.hbm [resolvable:$true] %s223
      %229 = dma.vmem_to_hbm [thread:$0]  %s222, 128, %s224, [#allocation4], 64, 64, 4
    $region49: #{tpu_custom_call.1} parent=1 // pred_fallthru
      _
    // Predicated region
    $region50: #{tpu_custom_call.1} parent=1 // pred_check
      _
    $region51: #{tpu_custom_call.1} parent=1 // pred_check_branch
      %231 = sbr.rel (0) target = $region53
    $region52: #{tpu_custom_call.1} parent=1 // pred_region
      %233 = vsyncadd [#allocation12], 0
      %s234 = sshll.u32 [#allocation11], 4
      %s235 = int_to_ptr.vmem [resolvable:$true] %s234
      %s236 = sshll.u32 %s8, 4
      %s237 = int_to_ptr.hbm [resolvable:$true] %s236
      %242 = dma.vmem_to_hbm [thread:$0]  %s235, 128, %s237, [#allocation12], 64, 64, 4
    $region53: #{tpu_custom_call.1} parent=1 // pred_fallthru
      _
    // Predicated region
    $region54: #{tpu_custom_call.1} parent=1 // pred_check
      _
    $region55: #{tpu_custom_call.1} parent=1 // pred_check_branch
      %244 = sbr.rel (0) target = $region57
    $region56: #{tpu_custom_call.1} parent=1 // pred_region
      %246 = vsyncadd [#allocation12], 0
      %s247 = sshll.u32 [#allocation13], 4
      %s248 = int_to_ptr.vmem [resolvable:$true] %s247
      %s249 = sshll.u32 %s9, 4
      %s250 = int_to_ptr.hbm [resolvable:$true] %s249
      %255 = dma.vmem_to_hbm [thread:$0]  %s248, 128, %s250, [#allocation12], 64, 64, 4
    $region57: #{tpu_custom_call.1} parent=1 // pred_fallthru
      _
    // Predicated region
    $region58: #{tpu_custom_call.1} parent=1 // pred_check
      _
    $region59: #{tpu_custom_call.1} parent=1 // pred_check_branch
      %257 = sbr.rel (0) target = $region61
    $region60: #{tpu_custom_call.1} parent=1 // pred_region
      %259 = dma.done [#allocation4], 128
    $region61: #{tpu_custom_call.1} parent=1 // pred_fallthru
      _
    // Predicated region
    $region62: #{tpu_custom_call.1} parent=1 // pred_check
      _
    $region63: #{tpu_custom_call.1} parent=1 // pred_check_branch
      %261 = sbr.rel (0) target = $region65
    $region64: #{tpu_custom_call.1} parent=1 // pred_region
      %263 = dma.done [#allocation12], 128
    $region65: #{tpu_custom_call.1} parent=1 // pred_fallthru
      _
    // Predicated region
    $region66: #{tpu_custom_call.1} parent=1 // pred_check
      _
    $region67: #{tpu_custom_call.1} parent=1 // pred_check_branch
      %265 = sbr.rel (0) target = $region69
    $region68: #{tpu_custom_call.1} parent=1 // pred_region
      %267 = dma.done [#allocation12], 128
    $region69: #{tpu_custom_call.1} parent=1 // pred_fallthru
      _
    %268 = vsyncpa [#allocation3], 1
    %269 = vsyncpa [#allocation6], 1
    %270 = vsyncpa [#allocation9], 1
    %271 = vsyncpa [#allocation4], 1
    %272 = vsyncpa [#allocation12], 1

</llo_original>
